<compile_context>
chip_gen: v6e
topology: v6e:2x2x1
jax: 0.10.0
libtpu: 0.0.40
codegen_flags: <defaults>
</compile_context>

<pallas_src>
import jax
import jax.numpy as jnp
from jax.experimental import pallas as pl
from jax.experimental.pallas import tpu as pltpu


_SUB_CHUNK = 256  # in-kernel compute chunk (rows); keeps one-hot vreg use bounded


def _gather_kernel(idx_ref, table_ref, out_ref):
    # idx_ref:   (TN, 1)   int32  -- indices for this output tile
    # table_ref: (num, dim)       -- full embedding table, VMEM-resident
    # out_ref:   (TN, dim)        -- gathered rows for this tile
    num = table_ref.shape[0]
    tn = out_ref.shape[0]
    table = table_ref[...]

    def gather_rows(idx_chunk, rows):
        # idx_chunk: (rows, 1) int32 -> one-hot (rows, num) -> MXU matmul.
        row_ids = jax.lax.broadcasted_iota(jnp.int32, (rows, num), 1)
        one_hot = (idx_chunk == row_ids).astype(table.dtype)
        # HIGHEST precision keeps f32 table values un-truncated (exact gather);
        # the matmul is tiny and hidden under the output writeback DMA.
        return jnp.dot(
            one_hot,
            table,
            preferred_element_type=jnp.float32,
            precision=jax.lax.Precision.HIGHEST,
        ).astype(out_ref.dtype)

    if tn <= _SUB_CHUNK or tn % _SUB_CHUNK != 0:
        # Small / single-shot tile: one matmul covers the whole block.
        out_ref[...] = gather_rows(idx_ref[...], tn)
    else:
        # Big tile: chunk the compute so the (rows, num) one-hot and the f32
        # accumulator stay small, while the output block stays large for
        # writeback efficiency.
        n_chunks = tn // _SUB_CHUNK

        def body(c, carry):
            start = pl.multiple_of(c * _SUB_CHUNK, _SUB_CHUNK)
            idx_chunk = idx_ref[pl.ds(start, _SUB_CHUNK), :]
            out_ref[pl.ds(start, _SUB_CHUNK), :] = gather_rows(idx_chunk, _SUB_CHUNK)
            return carry

        jax.lax.fori_loop(0, n_chunks, body, 0, unroll=True)


def prompt_embedding_forward(indices, table, *, tile_rows=None):
    """Equivalent of PromptEmbedding.forward: table[indices]."""
    num, dim = table.shape
    orig_shape = indices.shape

    flat_idx = indices.reshape(-1).astype(jnp.int32)
    n = flat_idx.shape[0]
    itemsize = jnp.dtype(table.dtype).itemsize
    bytes_per_row = max(dim * itemsize, 1)

    if tile_rows is None:
        # Single-step path: if the whole (sublane-padded) output fits in a
        # modest block (<= ~4 MiB), emit one grid step and no junk rows.
        n_pad8 = pl.cdiv(n, 8) * 8
        single_step_cap = max((4 << 20) // bytes_per_row, 8)
        if n_pad8 <= single_step_cap:
            tile_rows = n_pad8
        else:
            # Multi-step path: ~2 MiB output blocks (multiple of 256 rows),
            # capped so the double-buffered output stays <= ~24 MiB total
            # (safe under v7x's 32 MiB scoped-VMEM default).
            target_rows = (2 << 20) // bytes_per_row
            cap_rows = (12 << 20) // bytes_per_row
            tile_rows = max(256, (min(target_rows, cap_rows) // 256) * 256)

    n_pad = pl.cdiv(n, tile_rows) * tile_rows
    idx_padded = jnp.pad(flat_idx, (0, n_pad - n))   # pad value 0 (valid row)
    idx_2d = idx_padded.reshape(n_pad, 1)            # (n_pad, 1) int32

    grid = (n_pad // tile_rows,)

    # Scoped-VMEM budget: resident table + double-buffered idx + output tiles,
    # with slack.  Matters on v5e (16 MiB default) when tiles are scaled up.
    vmem_needed = (
        num * dim * itemsize
        + 2 * (tile_rows * 4)                 # idx blocks
        + 2 * (tile_rows * dim * itemsize)    # output double buffer
    )
    vmem_limit = min(max(2 * vmem_needed + (1 << 20), 32 << 20), 48 << 20)

    out = pl.pallas_call(
        _gather_kernel,
        out_shape=jax.ShapeDtypeStruct((n_pad, dim), table.dtype),
        grid=grid,
        in_specs=[
            # Per-tile indices: (TN, 1) block, moves with the grid.
            pl.BlockSpec((tile_rows, 1), lambda i: (i, 0)),
            # Full table: constant block index -> fetched once, stays resident.
            pl.BlockSpec((num, dim), lambda i: (0, 0)),
        ],
        out_specs=pl.BlockSpec((tile_rows, dim), lambda i: (i, 0)),
        compiler_params=pltpu.CompilerParams(
            dimension_semantics=("parallel",),
            vmem_limit_bytes=vmem_limit,
        ),
    )(idx_2d, table)

    if n_pad != n:
        # Overhang is at most tile_rows-1 rows (only 7 on the single-step
        # path); consumers that keep the padded layout can skip this slice.
        out = out[:n]
    return out.reshape(orig_shape + (dim,))


if __name__ == "__main__":
    # Module config (small, consistent with nn.Embedding(num, dim, float32)).
    soft_prompt_num = 8
    embedding_dim = 128

    key = jax.random.PRNGKey(0)
    k_table, k_idx = jax.random.split(key)

    # Deterministic "init_embeds" — synthetic embedding weight.
    embedding_weight = jax.random.normal(
        k_table, (soft_prompt_num, embedding_dim), dtype=jnp.float32
    )

    # Example indices: batch=2, seq=8 prompt-token ids in [0, soft_prompt_num).
    indices = jax.random.randint(
        k_idx, (2, 8), minval=0, maxval=soft_prompt_num, dtype=jnp.int32
    )

    out = prompt_embedding_forward(indices, embedding_weight)
    out = jax.block_until_ready(out)

    # Correctness check against plain-JAX gather (same semantics as torch).
    ref = embedding_weight[indices]
    assert out.shape == (2, 8, embedding_dim)
    assert out.dtype == jnp.float32
    assert jnp.allclose(out, ref, rtol=1e-6, atol=1e-6), (
        "Pallas gather mismatch vs reference"
    )

    print("KERNEL_OK")
</pallas_src>

<mosaic_0001>
module attributes {stable_mosaic.version = 11 : i64} {
  func.func @_gather_kernel(%arg0: i32, %arg1: memref<16x1xi32, #tpu.memory_space<vmem>>, %arg2: memref<8x128xf32, #tpu.memory_space<vmem>>, %arg3: memref<16x128xf32, #tpu.memory_space<vmem>>) attributes {dimension_semantics = [#tpu.dimension_semantics<parallel>], iteration_bounds = array<i64: 1>, scalar_prefetch = 0 : i64, scratch_operands = 0 : i64, tpu.core_type = #tpu.core_type<tc>, window_params = [{transform_indices = @transform_0, window_bounds = array<i64: 16, 1>}, {pipeline_mode = #tpu.pipeline_mode<synchronous>, transform_indices = @transform_1, window_bounds = array<i64: 8, 128>}, {transform_indices = @transform_2, window_bounds = array<i64: 16, 128>}]} {
    %c0 = arith.constant 0 : index
    %c0_0 = arith.constant 0 : index
    %0 = vector.load %arg2[%c0, %c0_0] : memref<8x128xf32, #tpu.memory_space<vmem>>, vector<8x128xf32>
    %c0_1 = arith.constant 0 : index
    %c0_2 = arith.constant 0 : index
    %1 = vector.load %arg1[%c0_1, %c0_2] : memref<16x1xi32, #tpu.memory_space<vmem>>, vector<16x1xi32>
    %2 = tpu.iota {dimensions = array<i32: 1>} : vector<16x8xi32>
    %3 = vector.broadcast %1 : vector<16x1xi32> to vector<16x8xi32>
    %4 = arith.cmpi eq, %3, %2 : vector<16x8xi32>
    %5 = arith.extui %4 : vector<16x8xi1> to vector<16x8xi32>
    %6 = arith.sitofp %5 : vector<16x8xi32> to vector<16x8xf32>
    %cst = arith.constant dense<0.000000e+00> : vector<16x128xf32>
    %7 = tpu.matmul %6, %0, %cst {dimension_numbers = #tpu.dot_dimension_numbers<[1], [0], [0], [1], [0, 0, 1, 1], [], []>, precision = #tpu.contract_precision<fp32>} : vector<16x8xf32>, vector<8x128xf32>, vector<16x128xf32> -> vector<16x128xf32>
    %c0_3 = arith.constant 0 : index
    %c0_4 = arith.constant 0 : index
    %8 = vector.load %arg3[%c0_3, %c0_4] : memref<16x128xf32, #tpu.memory_space<vmem>>, vector<16x128xf32>
    tpu.vector_store %arg3[%c0_3, %c0_4], %7 {strides = array<i32>} : memref<16x128xf32, #tpu.memory_space<vmem>>, vector<16x128xf32>,
    return
  }
  func.func @transform_0(%arg0: i32) -> (i32, i32) {
    %c0_i32 = arith.constant 0 : i32
    %c0_i32_0 = arith.constant 0 : i32
    return %arg0, %c0_i32 : i32, i32
  }
  func.func @transform_1(%arg0: i32) -> (i32, i32) {
    %c0_i32 = arith.constant 0 : i32
    %c0_i32_0 = arith.constant 0 : i32
    %c0_i32_1 = arith.constant 0 : i32
    return %c0_i32, %c0_i32_0 : i32, i32
  }
  func.func @transform_2(%arg0: i32) -> (i32, i32) {
    %c0_i32 = arith.constant 0 : i32
    %c0_i32_0 = arith.constant 0 : i32
    return %arg0, %c0_i32 : i32, i32
  }
}

</mosaic_0001>

<llo_original>
// kernel: tpu_custom_call.1
$region0: #{tpu_custom_call.1}
  #allocation0 [shape = 'u32[]', space=smem, size = 0x4, offset = 0x4, fixed_abs, tag = 'smem constant byte address 0x4 - core index']
  #allocation1 [shape = 'u32[144,128]{1,0:T(1,128)}', space=vmem, size = 0x12000, scoped, tag = 'internal scratch']
  %s0 = inlined_call_operand.vmem [shape: s32[16,1], index: 0, kind: input, shape index: {}]
  %s1 = inlined_call_operand.vmem [shape: f32[8,128], index: 1, kind: input, shape index: {}]
  %s2 = inlined_call_operand.hbm [shape: f32[16,128], index: 2, kind: output, shape index: {}]
  %s3 = sld [smem:[#allocation0]]
  $region18: #{tpu_custom_call.1} parent=0
    _
  %s5 = ssub.s32 1, %s3
  %s6 = scalar_select 0, %s5, %s3
  $region1: #{tpu_custom_call.1} parent=0
    #allocation2 [shape = 'u8[8192]{0}', space=vmem, size = 0x2000, scoped, tag = 'output window, operand 0, single buffered']
    #allocation3 [shape = 's32[1]{0}', space=sflag, size = 0x4, scoped, tag = 'scoped memory for tpu_custom_call.1']
    %7 = vsyncpa [#allocation3], 0
    // Predicated region
    $region2: #{tpu_custom_call.1} parent=1 // pred_check
      _
    $region3: #{tpu_custom_call.1} parent=1 // pred_check_branch
      %9 = sbr.rel (0) target = $region5
    $region4: #{tpu_custom_call.1} parent=1 // pred_region
      _
    $region5: #{tpu_custom_call.1} parent=1 // pred_fallthru
      _
    // Predicated region
    $region6: #{tpu_custom_call.1} parent=1 // pred_check
      _
    $region7: #{tpu_custom_call.1} parent=1 // pred_check_branch
      %11 = sbr.rel (0) target = $region9
    $region8: #{tpu_custom_call.1} parent=1 // pred_region
      _
    $region9: #{tpu_custom_call.1} parent=1 // pred_fallthru
      _
    %v12 = vld [vmem:[%s1] sm:$0xff]
    %v13 = vld [vmem:[%s0] sm:$0xff]
    %v14 = vld [vmem:[%s0 + $0x8] sm:$0xff]
    %v15 = vlaneseq
    %v16 = vand.u32 %v15, 127
    %17 = vset.pattern.permute.xlu0 0
    %18 = vperm.xlu0 %17, %v13
    %v19 = vpop.permute.xlu0 %18
    %20 = vset.pattern.permute.xlu0 0
    %21 = vperm.xlu0 %20, %v14
    %v22 = vpop.permute.xlu0 %21
    %vm23 = vcmp.eq.s32.totalorder %v19, %v16
    %vm24 = vcmp.eq.s32.totalorder %v22, %v16
    %v25 = vsel %vm23, 1, 0
    %v26 = vsel %vm24, 1, 0
    %v27 = vcvt.s32.f32 %v25
    %v28 = vcvt.s32.f32 %v26
    %vm29 = vcmask 64512
    %v31 = vsel %vm29, %v27, 0
    %v34 = vsel %vm29, %v28, 0
    %36 = vmatprep.subr.mxu0 0.0
    %37 = vmatpush1.msra.mxu0 0.0
    %38 = vmatprep.subr.mxu0 0.0
    %39 = vmatpush1.msra.mxu0 0.0
    %40 = vmatprep.subr.mxu0 0.0
    %41 = vmatpush1.msra.mxu0 0.0
    %42 = vmatprep.subr.mxu0 0.0
    %43 = vmatpush1.msra.mxu0 0.0
    %44 = vmatprep.subr.mxu0 0.0
    %45 = vmatpush1.msra.mxu0 0.0
    %46 = vmatprep.subr.mxu0 0.0
    %47 = vmatpush1.msra.mxu0 0.0
    %48 = vmatprep.subr.mxu0 0.0
    %49 = vmatpush1.msra.mxu0 0.0
    %50 = vmatprep.subr.mxu0 0.0
    %51 = vmatpush1.msra.mxu0 0.0
    %52 = vmatprep.subr.mxu0 0.0
    %53 = vmatpush1.msra.mxu0 0.0
    %54 = vmatprep.subr.mxu0 0.0
    %55 = vmatpush1.msra.mxu0 0.0
    %56 = vmatprep.subr.mxu0 0.0
    %57 = vmatpush1.msra.mxu0 0.0
    %58 = vmatprep.subr.mxu0 0.0
    %59 = vmatpush1.msra.mxu0 0.0
    %60 = vmatprep.subr.mxu0 0.0
    %61 = vmatpush1.msra.mxu0 0.0
    %62 = vmatprep.subr.mxu0 0.0
    %63 = vmatpush1.msra.mxu0 0.0
    %64 = vmatprep.subr.mxu0 0.0
    %65 = vmatpush1.msra.mxu0 0.0
    %66 = vmatprep.subr.mxu0 0.0
    %v67 = vand.u32 %v12, 4294901760
    %68 = vmatpush1.msra.mxu0 %v67
    %69 = vmatprep.subr.mxu0 0.0
    %70 = vmatpush2.msra.mxu0 0.0
    %71 = vmatprep.subr.mxu0 0.0
    %72 = vmatpush2.msra.mxu0 0.0
    %73 = vmatprep.subr.mxu0 0.0
    %74 = vmatpush2.msra.mxu0 0.0
    %75 = vmatprep.subr.mxu0 0.0
    %76 = vmatpush2.msra.mxu0 0.0
    %77 = vmatprep.subr.mxu0 0.0
    %78 = vmatpush2.msra.mxu0 0.0
    %79 = vmatprep.subr.mxu0 0.0
    %80 = vmatpush2.msra.mxu0 0.0
    %81 = vmatprep.subr.mxu0 0.0
    %82 = vmatpush2.msra.mxu0 0.0
    %83 = vmatprep.subr.mxu0 0.0
    %84 = vmatpush2.msra.mxu0 0.0
    %85 = vmatprep.subr.mxu0 0.0
    %86 = vmatpush2.msra.mxu0 0.0
    %87 = vmatprep.subr.mxu0 0.0
    %88 = vmatpush2.msra.mxu0 0.0
    %89 = vmatprep.subr.mxu0 0.0
    %90 = vmatpush2.msra.mxu0 0.0
    %91 = vmatprep.subr.mxu0 0.0
    %92 = vmatpush2.msra.mxu0 0.0
    %93 = vmatprep.subr.mxu0 0.0
    %94 = vmatpush2.msra.mxu0 0.0
    %95 = vmatprep.subr.mxu0 0.0
    %96 = vmatpush2.msra.mxu0 0.0
    %97 = vmatprep.subr.mxu0 0.0
    %98 = vmatpush2.msra.mxu0 0.0
    %99 = vmatprep.subr.mxu0 0.0
    %100 = vmatpush2.msra.mxu0 0.0
    %101 = vmatprep.mubr.f32.mxu0 0.0
    %v102 = vand.u32 %v31, 4294901760
    %v103 = vsub.f32 %v31, %v102
    %v104 = vand.u32 %v103, 4294901760
    %v105 = vsub.f32 %v103, %v104
    %v106 = vand.u32 %v105, 4294901760
    %107 = vmatmul.mubr.f32.gmra.mxu0 %v106
    %v108 = vpop.f32.mrf.mxu0
    %v109 = vadd.f32 0.0, %v108
    %v110 = vpop.f32.mrf.mxu0
    %111 = vmatprep.mubr.f32.mxu0 0.0
    %v112 = vand.u32 %v34, 4294901760
    %v113 = vsub.f32 %v34, %v112
    %v114 = vand.u32 %v113, 4294901760
    %v115 = vsub.f32 %v113, %v114
    %v116 = vand.u32 %v115, 4294901760
    %117 = vmatmul.mubr.f32.gmra.mxu0 %v116
    %v118 = vpop.f32.mrf.mxu0
    %v119 = vadd.f32 0.0, %v118
    %v120 = vpop.f32.mrf.mxu0
    %121 = vdwg.mxu0
    %122 = vmatprep.subr.mxu0 0.0
    %123 = vmatpush1.msra.mxu0 0.0
    %124 = vmatprep.subr.mxu0 0.0
    %125 = vmatpush1.msra.mxu0 0.0
    %126 = vmatprep.subr.mxu0 0.0
    %127 = vmatpush1.msra.mxu0 0.0
    %128 = vmatprep.subr.mxu0 0.0
    %129 = vmatpush1.msra.mxu0 0.0
    %130 = vmatprep.subr.mxu0 0.0
    %131 = vmatpush1.msra.mxu0 0.0
    %132 = vmatprep.subr.mxu0 0.0
    %133 = vmatpush1.msra.mxu0 0.0
    %134 = vmatprep.subr.mxu0 0.0
    %135 = vmatpush1.msra.mxu0 0.0
    %136 = vmatprep.subr.mxu0 0.0
    %137 = vmatpush1.msra.mxu0 0.0
    %138 = vmatprep.subr.mxu0 0.0
    %139 = vmatpush1.msra.mxu0 0.0
    %140 = vmatprep.subr.mxu0 0.0
    %141 = vmatpush1.msra.mxu0 0.0
    %142 = vmatprep.subr.mxu0 0.0
    %143 = vmatpush1.msra.mxu0 0.0
    %144 = vmatprep.subr.mxu0 0.0
    %145 = vmatpush1.msra.mxu0 0.0
    %146 = vmatprep.subr.mxu0 0.0
    %147 = vmatpush1.msra.mxu0 0.0
    %148 = vmatprep.subr.mxu0 0.0
    %149 = vmatpush1.msra.mxu0 0.0
    %150 = vmatprep.subr.mxu0 0.0
    %151 = vmatpush1.msra.mxu0 0.0
    %152 = vmatprep.subr.mxu0 0.0
    %v153 = vand.u32 %v12, 4294901760
    %v154 = vsub.f32 %v12, %v153
    %v155 = vand.u32 %v154, 4294901760
    %v156 = vsub.f32 %v154, %v155
    %v157 = vand.u32 %v156, 4294901760
    %158 = vmatpush1.msra.mxu0 %v157
    %159 = vmatprep.subr.mxu0 0.0
    %160 = vmatpush2.msra.mxu0 0.0
    %161 = vmatprep.subr.mxu0 0.0
    %162 = vmatpush2.msra.mxu0 0.0
    %163 = vmatprep.subr.mxu0 0.0
    %164 = vmatpush2.msra.mxu0 0.0
    %165 = vmatprep.subr.mxu0 0.0
    %166 = vmatpush2.msra.mxu0 0.0
    %167 = vmatprep.subr.mxu0 0.0
    %168 = vmatpush2.msra.mxu0 0.0
    %169 = vmatprep.subr.mxu0 0.0
    %170 = vmatpush2.msra.mxu0 0.0
    %171 = vmatprep.subr.mxu0 0.0
    %172 = vmatpush2.msra.mxu0 0.0
    %173 = vmatprep.subr.mxu0 0.0
    %174 = vmatpush2.msra.mxu0 0.0
    %175 = vmatprep.subr.mxu0 0.0
    %176 = vmatpush2.msra.mxu0 0.0
    %177 = vmatprep.subr.mxu0 0.0
    %178 = vmatpush2.msra.mxu0 0.0
    %179 = vmatprep.subr.mxu0 0.0
    %180 = vmatpush2.msra.mxu0 0.0
    %181 = vmatprep.subr.mxu0 0.0
    %182 = vmatpush2.msra.mxu0 0.0
    %183 = vmatprep.subr.mxu0 0.0
    %184 = vmatpush2.msra.mxu0 0.0
    %185 = vmatprep.subr.mxu0 0.0
    %186 = vmatpush2.msra.mxu0 0.0
    %187 = vmatprep.subr.mxu0 0.0
    %188 = vmatpush2.msra.mxu0 0.0
    %189 = vmatprep.subr.mxu0 0.0
    %190 = vmatpush2.msra.mxu0 0.0
    %191 = vmatprep.mubr.f32.mxu0 0.0
    %v192 = vand.u32 %v31, 4294901760
    %193 = vmatmul.mubr.f32.gmra.mxu0 %v192
    %v194 = vpop.f32.mrf.mxu0
    %v195 = vadd.f32 %v109, %v194
    %v196 = vpop.f32.mrf.mxu0
    %197 = vmatprep.mubr.f32.mxu0 0.0
    %v198 = vand.u32 %v34, 4294901760
    %199 = vmatmul.mubr.f32.gmra.mxu0 %v198
    %v200 = vpop.f32.mrf.mxu0
    %v201 = vadd.f32 %v119, %v200
    %v202 = vpop.f32.mrf.mxu0
    %203 = vdwg.mxu0
    %204 = vmatprep.subr.mxu0 0.0
    %205 = vmatpush1.msra.mxu0 0.0
    %206 = vmatprep.subr.mxu0 0.0
    %207 = vmatpush1.msra.mxu0 0.0
    %208 = vmatprep.subr.mxu0 0.0
    %209 = vmatpush1.msra.mxu0 0.0
    %210 = vmatprep.subr.mxu0 0.0
    %211 = vmatpush1.msra.mxu0 0.0
    %212 = vmatprep.subr.mxu0 0.0
    %213 = vmatpush1.msra.mxu0 0.0
    %214 = vmatprep.subr.mxu0 0.0
    %215 = vmatpush1.msra.mxu0 0.0
    %216 = vmatprep.subr.mxu0 0.0
    %217 = vmatpush1.msra.mxu0 0.0
    %218 = vmatprep.subr.mxu0 0.0
    %219 = vmatpush1.msra.mxu0 0.0
    %220 = vmatprep.subr.mxu0 0.0
    %221 = vmatpush1.msra.mxu0 0.0
    %222 = vmatprep.subr.mxu0 0.0
    %223 = vmatpush1.msra.mxu0 0.0
    %224 = vmatprep.subr.mxu0 0.0
    %225 = vmatpush1.msra.mxu0 0.0
    %226 = vmatprep.subr.mxu0 0.0
    %227 = vmatpush1.msra.mxu0 0.0
    %228 = vmatprep.subr.mxu0 0.0
    %229 = vmatpush1.msra.mxu0 0.0
    %230 = vmatprep.subr.mxu0 0.0
    %231 = vmatpush1.msra.mxu0 0.0
    %232 = vmatprep.subr.mxu0 0.0
    %233 = vmatpush1.msra.mxu0 0.0
    %234 = vmatprep.subr.mxu0 0.0
    %v235 = vand.u32 %v12, 4294901760
    %v236 = vsub.f32 %v12, %v235
    %237 = vmatpush1.msra.mxu0 %v236
    %238 = vmatprep.subr.mxu0 0.0
    %239 = vmatpush2.msra.mxu0 0.0
    %240 = vmatprep.subr.mxu0 0.0
    %241 = vmatpush2.msra.mxu0 0.0
    %242 = vmatprep.subr.mxu0 0.0
    %243 = vmatpush2.msra.mxu0 0.0
    %244 = vmatprep.subr.mxu0 0.0
    %245 = vmatpush2.msra.mxu0 0.0
    %246 = vmatprep.subr.mxu0 0.0
    %247 = vmatpush2.msra.mxu0 0.0
    %248 = vmatprep.subr.mxu0 0.0
    %249 = vmatpush2.msra.mxu0 0.0
    %250 = vmatprep.subr.mxu0 0.0
    %251 = vmatpush2.msra.mxu0 0.0
    %252 = vmatprep.subr.mxu0 0.0
    %253 = vmatpush2.msra.mxu0 0.0
    %254 = vmatprep.subr.mxu0 0.0
    %255 = vmatpush2.msra.mxu0 0.0
    %256 = vmatprep.subr.mxu0 0.0
    %257 = vmatpush2.msra.mxu0 0.0
    %258 = vmatprep.subr.mxu0 0.0
    %259 = vmatpush2.msra.mxu0 0.0
    %260 = vmatprep.subr.mxu0 0.0
    %261 = vmatpush2.msra.mxu0 0.0
    %262 = vmatprep.subr.mxu0 0.0
    %263 = vmatpush2.msra.mxu0 0.0
    %264 = vmatprep.subr.mxu0 0.0
    %265 = vmatpush2.msra.mxu0 0.0
    %266 = vmatprep.subr.mxu0 0.0
    %267 = vmatpush2.msra.mxu0 0.0
    %268 = vmatprep.subr.mxu0 0.0
    %269 = vmatpush2.msra.mxu0 0.0
    %270 = vmatprep.mubr.f32.mxu0 0.0
    %v271 = vand.u32 %v31, 4294901760
    %v272 = vsub.f32 %v31, %v271
    %273 = vmatmul.mubr.f32.gmra.mxu0 %v272
    %v274 = vpop.f32.mrf.mxu0
    %v275 = vadd.f32 %v195, %v274
    %v276 = vpop.f32.mrf.mxu0
    %277 = vmatprep.mubr.f32.mxu0 0.0
    %v278 = vand.u32 %v34, 4294901760
    %v279 = vsub.f32 %v34, %v278
    %280 = vmatmul.mubr.f32.gmra.mxu0 %v279
    %v281 = vpop.f32.mrf.mxu0
    %v282 = vadd.f32 %v201, %v281
    %v283 = vpop.f32.mrf.mxu0
    %284 = vdwg.mxu0
    %285 = vmatprep.subr.mxu0 0.0
    %286 = vmatpush1.msra.mxu0 0.0
    %287 = vmatprep.subr.mxu0 0.0
    %288 = vmatpush1.msra.mxu0 0.0
    %289 = vmatprep.subr.mxu0 0.0
    %290 = vmatpush1.msra.mxu0 0.0
    %291 = vmatprep.subr.mxu0 0.0
    %292 = vmatpush1.msra.mxu0 0.0
    %293 = vmatprep.subr.mxu0 0.0
    %294 = vmatpush1.msra.mxu0 0.0
    %295 = vmatprep.subr.mxu0 0.0
    %296 = vmatpush1.msra.mxu0 0.0
    %297 = vmatprep.subr.mxu0 0.0
    %298 = vmatpush1.msra.mxu0 0.0
    %299 = vmatprep.subr.mxu0 0.0
    %300 = vmatpush1.msra.mxu0 0.0
    %301 = vmatprep.subr.mxu0 0.0
    %302 = vmatpush1.msra.mxu0 0.0
    %303 = vmatprep.subr.mxu0 0.0
    %304 = vmatpush1.msra.mxu0 0.0
    %305 = vmatprep.subr.mxu0 0.0
    %306 = vmatpush1.msra.mxu0 0.0
    %307 = vmatprep.subr.mxu0 0.0
    %308 = vmatpush1.msra.mxu0 0.0
    %309 = vmatprep.subr.mxu0 0.0
    %310 = vmatpush1.msra.mxu0 0.0
    %311 = vmatprep.subr.mxu0 0.0
    %312 = vmatpush1.msra.mxu0 0.0
    %313 = vmatprep.subr.mxu0 0.0
    %314 = vmatpush1.msra.mxu0 0.0
    %315 = vmatprep.subr.mxu0 0.0
    %v316 = vand.u32 %v12, 4294901760
    %317 = vmatpush1.msra.mxu0 %v316
    %318 = vmatprep.subr.mxu0 0.0
    %319 = vmatpush2.msra.mxu0 0.0
    %320 = vmatprep.subr.mxu0 0.0
    %321 = vmatpush2.msra.mxu0 0.0
    %322 = vmatprep.subr.mxu0 0.0
    %323 = vmatpush2.msra.mxu0 0.0
    %324 = vmatprep.subr.mxu0 0.0
    %325 = vmatpush2.msra.mxu0 0.0
    %326 = vmatprep.subr.mxu0 0.0
    %327 = vmatpush2.msra.mxu0 0.0
    %328 = vmatprep.subr.mxu0 0.0
    %329 = vmatpush2.msra.mxu0 0.0
    %330 = vmatprep.subr.mxu0 0.0
    %331 = vmatpush2.msra.mxu0 0.0
    %332 = vmatprep.subr.mxu0 0.0
    %333 = vmatpush2.msra.mxu0 0.0
    %334 = vmatprep.subr.mxu0 0.0
    %335 = vmatpush2.msra.mxu0 0.0
    %336 = vmatprep.subr.mxu0 0.0
    %337 = vmatpush2.msra.mxu0 0.0
    %338 = vmatprep.subr.mxu0 0.0
    %339 = vmatpush2.msra.mxu0 0.0
    %340 = vmatprep.subr.mxu0 0.0
    %341 = vmatpush2.msra.mxu0 0.0
    %342 = vmatprep.subr.mxu0 0.0
    %343 = vmatpush2.msra.mxu0 0.0
    %344 = vmatprep.subr.mxu0 0.0
    %345 = vmatpush2.msra.mxu0 0.0
    %346 = vmatprep.subr.mxu0 0.0
    %347 = vmatpush2.msra.mxu0 0.0
    %348 = vmatprep.subr.mxu0 0.0
    %349 = vmatpush2.msra.mxu0 0.0
    %350 = vmatprep.mubr.f32.mxu0 0.0
    %v351 = vand.u32 %v31, 4294901760
    %v352 = vsub.f32 %v31, %v351
    %v353 = vand.u32 %v352, 4294901760
    %354 = vmatmul.mubr.f32.gmra.mxu0 %v353
    %v355 = vpop.f32.mrf.mxu0
    %v356 = vadd.f32 %v275, %v355
    %v357 = vpop.f32.mrf.mxu0
    %358 = vmatprep.mubr.f32.mxu0 0.0
    %v359 = vand.u32 %v34, 4294901760
    %v360 = vsub.f32 %v34, %v359
    %v361 = vand.u32 %v360, 4294901760
    %362 = vmatmul.mubr.f32.gmra.mxu0 %v361
    %v363 = vpop.f32.mrf.mxu0
    %v364 = vadd.f32 %v282, %v363
    %v365 = vpop.f32.mrf.mxu0
    %366 = vdwg.mxu0
    %367 = vmatprep.subr.mxu0 0.0
    %368 = vmatpush1.msra.mxu0 0.0
    %369 = vmatprep.subr.mxu0 0.0
    %370 = vmatpush1.msra.mxu0 0.0
    %371 = vmatprep.subr.mxu0 0.0
    %372 = vmatpush1.msra.mxu0 0.0
    %373 = vmatprep.subr.mxu0 0.0
    %374 = vmatpush1.msra.mxu0 0.0
    %375 = vmatprep.subr.mxu0 0.0
    %376 = vmatpush1.msra.mxu0 0.0
    %377 = vmatprep.subr.mxu0 0.0
    %378 = vmatpush1.msra.mxu0 0.0
    %379 = vmatprep.subr.mxu0 0.0
    %380 = vmatpush1.msra.mxu0 0.0
    %381 = vmatprep.subr.mxu0 0.0
    %382 = vmatpush1.msra.mxu0 0.0
    %383 = vmatprep.subr.mxu0 0.0
    %384 = vmatpush1.msra.mxu0 0.0
    %385 = vmatprep.subr.mxu0 0.0
    %386 = vmatpush1.msra.mxu0 0.0
    %387 = vmatprep.subr.mxu0 0.0
    %388 = vmatpush1.msra.mxu0 0.0
    %389 = vmatprep.subr.mxu0 0.0
    %390 = vmatpush1.msra.mxu0 0.0
    %391 = vmatprep.subr.mxu0 0.0
    %392 = vmatpush1.msra.mxu0 0.0
    %393 = vmatprep.subr.mxu0 0.0
    %394 = vmatpush1.msra.mxu0 0.0
    %395 = vmatprep.subr.mxu0 0.0
    %396 = vmatpush1.msra.mxu0 0.0
    %397 = vmatprep.subr.mxu0 0.0
    %v398 = vand.u32 %v12, 4294901760
    %v399 = vsub.f32 %v12, %v398
    %v400 = vand.u32 %v399, 4294901760
    %401 = vmatpush1.msra.mxu0 %v400
    %402 = vmatprep.subr.mxu0 0.0
    %403 = vmatpush2.msra.mxu0 0.0
    %404 = vmatprep.subr.mxu0 0.0
    %405 = vmatpush2.msra.mxu0 0.0
    %406 = vmatprep.subr.mxu0 0.0
    %407 = vmatpush2.msra.mxu0 0.0
    %408 = vmatprep.subr.mxu0 0.0
    %409 = vmatpush2.msra.mxu0 0.0
    %410 = vmatprep.subr.mxu0 0.0
    %411 = vmatpush2.msra.mxu0 0.0
    %412 = vmatprep.subr.mxu0 0.0
    %413 = vmatpush2.msra.mxu0 0.0
    %414 = vmatprep.subr.mxu0 0.0
    %415 = vmatpush2.msra.mxu0 0.0
    %416 = vmatprep.subr.mxu0 0.0
    %417 = vmatpush2.msra.mxu0 0.0
    %418 = vmatprep.subr.mxu0 0.0
    %419 = vmatpush2.msra.mxu0 0.0
    %420 = vmatprep.subr.mxu0 0.0
    %421 = vmatpush2.msra.mxu0 0.0
    %422 = vmatprep.subr.mxu0 0.0
    %423 = vmatpush2.msra.mxu0 0.0
    %424 = vmatprep.subr.mxu0 0.0
    %425 = vmatpush2.msra.mxu0 0.0
    %426 = vmatprep.subr.mxu0 0.0
    %427 = vmatpush2.msra.mxu0 0.0
    %428 = vmatprep.subr.mxu0 0.0
    %429 = vmatpush2.msra.mxu0 0.0
    %430 = vmatprep.subr.mxu0 0.0
    %431 = vmatpush2.msra.mxu0 0.0
    %432 = vmatprep.subr.mxu0 0.0
    %433 = vmatpush2.msra.mxu0 0.0
    %434 = vmatprep.mubr.f32.mxu0 0.0
    %v435 = vand.u32 %v31, 4294901760
    %436 = vmatmul.mubr.f32.gmra.mxu0 %v435
    %v437 = vpop.f32.mrf.mxu0
    %v438 = vadd.f32 %v356, %v437
    %v439 = vpop.f32.mrf.mxu0
    %440 = vmatprep.mubr.f32.mxu0 0.0
    %v441 = vand.u32 %v34, 4294901760
    %442 = vmatmul.mubr.f32.gmra.mxu0 %v441
    %v443 = vpop.f32.mrf.mxu0
    %v444 = vadd.f32 %v364, %v443
    %v445 = vpop.f32.mrf.mxu0
    %446 = vdwg.mxu0
    %447 = vmatprep.subr.mxu0 0.0
    %448 = vmatpush1.msra.mxu0 0.0
    %449 = vmatprep.subr.mxu0 0.0
    %450 = vmatpush1.msra.mxu0 0.0
    %451 = vmatprep.subr.mxu0 0.0
    %452 = vmatpush1.msra.mxu0 0.0
    %453 = vmatprep.subr.mxu0 0.0
    %454 = vmatpush1.msra.mxu0 0.0
    %455 = vmatprep.subr.mxu0 0.0
    %456 = vmatpush1.msra.mxu0 0.0
    %457 = vmatprep.subr.mxu0 0.0
    %458 = vmatpush1.msra.mxu0 0.0
    %459 = vmatprep.subr.mxu0 0.0
    %460 = vmatpush1.msra.mxu0 0.0
    %461 = vmatprep.subr.mxu0 0.0
    %462 = vmatpush1.msra.mxu0 0.0
    %463 = vmatprep.subr.mxu0 0.0
    %464 = vmatpush1.msra.mxu0 0.0
    %465 = vmatprep.subr.mxu0 0.0
    %466 = vmatpush1.msra.mxu0 0.0
    %467 = vmatprep.subr.mxu0 0.0
    %468 = vmatpush1.msra.mxu0 0.0
    %469 = vmatprep.subr.mxu0 0.0
    %470 = vmatpush1.msra.mxu0 0.0
    %471 = vmatprep.subr.mxu0 0.0
    %472 = vmatpush1.msra.mxu0 0.0
    %473 = vmatprep.subr.mxu0 0.0
    %474 = vmatpush1.msra.mxu0 0.0
    %475 = vmatprep.subr.mxu0 0.0
    %476 = vmatpush1.msra.mxu0 0.0
    %477 = vmatprep.subr.mxu0 0.0
    %v478 = vand.u32 %v12, 4294901760
    %479 = vmatpush1.msra.mxu0 %v478
    %480 = vmatprep.subr.mxu0 0.0
    %481 = vmatpush2.msra.mxu0 0.0
    %482 = vmatprep.subr.mxu0 0.0
    %483 = vmatpush2.msra.mxu0 0.0
    %484 = vmatprep.subr.mxu0 0.0
    %485 = vmatpush2.msra.mxu0 0.0
    %486 = vmatprep.subr.mxu0 0.0
    %487 = vmatpush2.msra.mxu0 0.0
    %488 = vmatprep.subr.mxu0 0.0
    %489 = vmatpush2.msra.mxu0 0.0
    %490 = vmatprep.subr.mxu0 0.0
    %491 = vmatpush2.msra.mxu0 0.0
    %492 = vmatprep.subr.mxu0 0.0
    %493 = vmatpush2.msra.mxu0 0.0
    %494 = vmatprep.subr.mxu0 0.0
    %495 = vmatpush2.msra.mxu0 0.0
    %496 = vmatprep.subr.mxu0 0.0
    %497 = vmatpush2.msra.mxu0 0.0
    %498 = vmatprep.subr.mxu0 0.0
    %499 = vmatpush2.msra.mxu0 0.0
    %500 = vmatprep.subr.mxu0 0.0
    %501 = vmatpush2.msra.mxu0 0.0
    %502 = vmatprep.subr.mxu0 0.0
    %503 = vmatpush2.msra.mxu0 0.0
    %504 = vmatprep.subr.mxu0 0.0
    %505 = vmatpush2.msra.mxu0 0.0
    %506 = vmatprep.subr.mxu0 0.0
    %507 = vmatpush2.msra.mxu0 0.0
    %508 = vmatprep.subr.mxu0 0.0
    %509 = vmatpush2.msra.mxu0 0.0
    %510 = vmatprep.subr.mxu0 0.0
    %511 = vmatpush2.msra.mxu0 0.0
    %512 = vmatprep.mubr.f32.mxu0 0.0
    %v513 = vand.u32 %v31, 4294901760
    %514 = vmatmul.mubr.f32.gmra.mxu0 %v513
    %v515 = vpop.f32.mrf.mxu0
    %v516 = vadd.f32 %v438, %v515
    %v517 = vpop.f32.mrf.mxu0
    %518 = vmatprep.mubr.f32.mxu0 0.0
    %v519 = vand.u32 %v34, 4294901760
    %520 = vmatmul.mubr.f32.gmra.mxu0 %v519
    %v521 = vpop.f32.mrf.mxu0
    %v522 = vadd.f32 %v444, %v521
    %v523 = vpop.f32.mrf.mxu0
    %524 = vdwg.mxu0
    %525 = vst [vmem:[#allocation2] sm:$0xff] %v516
    %526 = vst [vmem:[#allocation2 + $0x8] sm:$0xff] %v522
    // Predicated region
    $region10: #{tpu_custom_call.1} parent=1 // pred_check
      _
    $region11: #{tpu_custom_call.1} parent=1 // pred_check_branch
      %528 = sbr.rel (0) target = $region13
    $region12: #{tpu_custom_call.1} parent=1 // pred_region
      %s530 = ssub.s32 256, 256
      %531 = vsyncadd [#allocation3], %s530
      %s532 = sshll.u32 [#allocation2], 4
      %s533 = int_to_ptr.vmem [resolvable:$true] %s532
      %538 = dma.vmem_to_hbm [thread:$0]  %s533, 256, %s2, [#allocation3], 128, 128, 8
    $region13: #{tpu_custom_call.1} parent=1 // pred_fallthru
      _
    // Predicated region
    $region14: #{tpu_custom_call.1} parent=1 // pred_check
      _
    $region15: #{tpu_custom_call.1} parent=1 // pred_check_branch
      %540 = sbr.rel (0) target = $region17
    $region16: #{tpu_custom_call.1} parent=1 // pred_region
      %541 = dma.done [#allocation3], 256
    $region17: #{tpu_custom_call.1} parent=1 // pred_fallthru
      _
    %542 = vsyncpa [#allocation3], 1

</llo_original>
